<compile_context>
chip_gen: v6e
topology: v6e:2x2x1
jax: 0.10.0
libtpu: 0.0.40
codegen_flags: <defaults>
</compile_context>

<pallas_src>
import functools

import jax
import jax.numpy as jnp
from jax.experimental import pallas as pl
from jax.experimental.pallas import tpu as pltpu


# ---------------------------------------------------------------------------
# Kernel
# ---------------------------------------------------------------------------
def gnet_kernel(x_ref, w_ref, b_ref, x1_ref, x2_ref, *, out_dim):
    """Fused forward for one batch tile.

    x1_ref <- softmax((x @ w2 + b2) * pw + pb, axis=1)  (affine folded into w/b)
    x2_ref <- x @ w3 + b3
    fc1 (dead compute in the PyTorch forward) is never computed or DMA'd.
    """
    x = x_ref[...]                                              # (tb, D)

    # Single MXU call: [fc2_folded | fc3] fused along the output (lane) axis.
    z = jnp.dot(x, w_ref[...], preferred_element_type=jnp.float32) + b_ref[...]

    # Masked softmax over the first `out_dim` columns; the fc3 column is
    # excluded via -inf (exp -> 0, contributes nothing to the denominator).
    col = jax.lax.broadcasted_iota(jnp.int32, z.shape, 1)
    is_logit = col < out_dim
    logits = jnp.where(is_logit, z, -jnp.inf)
    logits = logits - jnp.max(logits, axis=1, keepdims=True)
    e = jnp.exp(logits)
    # Exact division: the kernel is DMA/grid-overhead bound, so the approximate
    # EUP reciprocal would buy no wall-clock but cost ~1e-4 relative error.
    probs = e / jnp.sum(e, axis=1, keepdims=True)

    x1_ref[...] = probs[:, :out_dim]
    x2_ref[...] = z[:, out_dim:out_dim + 1]


# ---------------------------------------------------------------------------
# Param prep (done ONCE at init)
# ---------------------------------------------------------------------------
def prepare_fused_params(params, *, bf16_threshold_d=1024):
    """Fold pretrain affine into fc2 and fuse fc2/fc3 into one weight/bias.

    For large contraction dims the fused weight is stored in bf16 (the x DMA
    is the binding resource; the MXU is bf16-native on v5e/v6e/v7x).
    """
    w1, b1, w2, b2, pw, pb, w3, b3 = params
    del w1, b1  # fc1's output is dead in the PyTorch forward
    w_fused = jnp.concatenate([w2 * pw, w3], axis=1)            # (D, out_dim + 1)
    b_fused = jnp.concatenate([b2 * pw + pb, b3], axis=1)       # (1, out_dim + 1)
    if w_fused.shape[0] >= bf16_threshold_d:
        w_fused = w_fused.astype(jnp.bfloat16)
    return w_fused, b_fused.astype(jnp.float32)


# ---------------------------------------------------------------------------
# Tile sizing helpers
# ---------------------------------------------------------------------------
def _round_up(n, m):
    return ((n + m - 1) // m) * m


def _vmem_capacity_bytes():
    try:
        return int(pltpu.get_tpu_info().vmem_capacity_bytes)
    except Exception:
        return 64 << 20  # conservative default: v7x per-TensorCore VMEM


def _pick_batch_tile(B, D, out_dim, x_bytes, w_bytes, vmem_capacity):
    """Largest multiple-of-8 batch tile fitting a ~40% VMEM budget (<= 2048)."""
    width = out_dim + 1
    budget = int(0.4 * vmem_capacity)                    # headroom for scratch
    resident = 2 * (D * width * w_bytes + width * 4)     # weight+bias dbl-buffers
    per_row = 2 * D * x_bytes + 2 * out_dim * 4 + 2 * 4  # x + both output dbl-buffers
    tb = (budget - resident) // max(per_row, 1)
    tb = max(8, min(int(tb), 2048))                      # 1-2K rows amortize step cost
    tb = (tb // 8) * 8
    if B <= 8:
        return B                                         # single tiny tile, no padding
    # Guarantee >= 2 grid steps so ("parallel",) can shard across v7x's 2 TCs.
    tb = min(tb, _round_up(pl.cdiv(B, 2), 8))
    return max(8, tb)


# ---------------------------------------------------------------------------
# Forward
# ---------------------------------------------------------------------------
def gnet_forward(x, y, fused_params, out_dim):
    """x: (B, input_dim), y: unused (matches the PyTorch forward signature)."""
    del y  # unused in the reference forward
    w, b = fused_params
    B, D = x.shape
    width = w.shape[1]                                   # out_dim + 1
    # G__Net applies fc2 directly to x, so input_dim must equal hl_num.
    assert w.shape[0] == D, "input_dim must equal hl_num (fc2 is applied to x)"
    assert width == out_dim + 1

    # Match the (possibly bf16) fused-weight dtype so the x DMA shrinks too.
    x = x.astype(w.dtype)
    x_bytes = jnp.dtype(x.dtype).itemsize
    w_bytes = jnp.dtype(w.dtype).itemsize

    capacity = _vmem_capacity_bytes()
    tb = _pick_batch_tile(B, D, out_dim, x_bytes, w_bytes, capacity)

    # Pad the batch to a multiple of the tile (padded rows are discarded below).
    B_pad = pl.cdiv(B, tb) * tb
    if B_pad != B:
        x = jnp.pad(x, ((0, B_pad - B), (0, 0)))
    grid = (B_pad // tb,)

    # Explicit scoped-VMEM limit sized from the chosen tiles (v5e default 16 MiB).
    needed = (2 * (D * width * w_bytes + width * 4)
              + tb * (2 * D * x_bytes + 2 * out_dim * 4 + 2 * 4))
    vmem_limit = max(32 << 20, needed + (8 << 20))
    vmem_limit = min(vmem_limit, int(0.9 * capacity))
    vmem_limit = max(vmem_limit, needed + (2 << 20))

    kernel = functools.partial(gnet_kernel, out_dim=out_dim)
    x1, x2 = pl.pallas_call(
        kernel,
        out_shape=(
            jax.ShapeDtypeStruct((B_pad, out_dim), jnp.float32),
            jax.ShapeDtypeStruct((B_pad, 1), jnp.float32),
        ),
        grid=grid,
        in_specs=[
            pl.BlockSpec((tb, D), lambda i: (i, 0)),       # x: tiled on batch
            pl.BlockSpec((D, width), lambda i: (0, 0)),    # fused weight (resident)
            pl.BlockSpec((1, width), lambda i: (0, 0)),    # fused bias (resident)
        ],
        out_specs=[
            pl.BlockSpec((tb, out_dim), lambda i: (i, 0)),  # softmax probs
            pl.BlockSpec((tb, 1), lambda i: (i, 0)),        # fc3 output
        ],
        compiler_params=pltpu.CompilerParams(
            dimension_semantics=("parallel",),              # megacore-shardable
            vmem_limit_bytes=int(vmem_limit),
        ),
    )(x, w, b)

    if B_pad != B:
        x1, x2 = x1[:B], x2[:B]
    return x1, x2


# ---------------------------------------------------------------------------
# Synthetic params + pure-JAX reference
# ---------------------------------------------------------------------------
def init_params(key, input_dim, hl_num, out_dim):
    """Deterministic synthetic params (shapes match the nn.Linear layers).

    Weights are stored already-transposed: (in_features, out_features).
    Biases / pretrain params are (1, features) rows so they broadcast over batch.
    """
    ks = jax.random.split(key, 8)

    def u(k, shape, fan_in):
        bound = 1.0 / jnp.sqrt(jnp.float32(fan_in))
        return jax.random.uniform(k, shape, jnp.float32, -bound, bound)

    w1 = u(ks[0], (input_dim, hl_num), input_dim)     # fc1.weight^T (dead)
    b1 = u(ks[1], (1, hl_num), input_dim)             # fc1.bias     (dead)
    w2 = u(ks[2], (hl_num, out_dim), hl_num)          # fc2.weight^T
    b2 = u(ks[3], (1, out_dim), hl_num)               # fc2.bias
    w3 = u(ks[4], (input_dim, 1), input_dim)          # fc3.weight^T
    b3 = u(ks[5], (1, 1), input_dim)                  # fc3.bias
    pw = jax.random.normal(ks[6], (1, out_dim), jnp.float32)  # pretrain_weight
    pb = jax.random.normal(ks[7], (1, out_dim), jnp.float32)  # pretrain_bias
    return (w1, b1, w2, b2, pw, pb, w3, b3)


def reference_forward(x, params):
    """Pure-JAX reference mirroring the PyTorch forward (unfused math)."""
    w1, b1, w2, b2, pw, pb, w3, b3 = params
    _ = x @ w1 + b1                      # fc1: dead, overwritten (kept for clarity)
    z = x @ w2 + b2
    z = z * pw + pb
    x1 = jax.nn.softmax(z, axis=1)
    x2 = x @ w3 + b3
    return x1, x2


if __name__ == "__main__":
    # Small shapes consistent with the module. input_dim must equal hl_num for
    # the PyTorch forward to be well-formed (fc2 is applied to x).
    batch = 8
    input_dim = 32
    hl_num = 32
    out_dim = 8

    key = jax.random.PRNGKey(0)
    k_x, k_y, k_p = jax.random.split(key, 3)
    x = jax.random.normal(k_x, (batch, input_dim), jnp.float32)
    y = jax.random.normal(k_y, (batch, 1), jnp.float32)   # unused, as in PyTorch
    params = init_params(k_p, input_dim, hl_num, out_dim)
    fused = prepare_fused_params(params)                  # one-time param prep

    # Main run: single-tile path.
    x1, x2 = gnet_forward(x, y, fused, out_dim)
    jax.block_until_ready((x1, x2))

    r1, r2 = reference_forward(x, params)
    assert x1.shape == (batch, out_dim) and x2.shape == (batch, 1)
    assert jnp.allclose(x1, r1, atol=1e-5, rtol=1e-5)
    assert jnp.allclose(x2, r2, atol=1e-5, rtol=1e-5)

    # Second run: non-multiple batch exercises cdiv/padding + >=2 grid steps.
    batch2 = 20
    x_b = jax.random.normal(jax.random.PRNGKey(1), (batch2, input_dim), jnp.float32)
    y_b = jnp.zeros((batch2, 1), jnp.float32)
    x1_b, x2_b = gnet_forward(x_b, y_b, fused, out_dim)
    jax.block_until_ready((x1_b, x2_b))
    r1_b, r2_b = reference_forward(x_b, params)
    assert x1_b.shape == (batch2, out_dim) and x2_b.shape == (batch2, 1)
    assert jnp.allclose(x1_b, r1_b, atol=1e-5, rtol=1e-5)
    assert jnp.allclose(x2_b, r2_b, atol=1e-5, rtol=1e-5)

    print("KERNEL_OK")
</pallas_src>

<mosaic_0001>
module attributes {stable_mosaic.version = 11 : i64} {
  func.func @gnet_kernel(%arg0: i32, %arg1: memref<8x32xf32, #tpu.memory_space<vmem>>, %arg2: memref<32x9xf32, #tpu.memory_space<vmem>>, %arg3: memref<1x9xf32, #tpu.memory_space<vmem>>, %arg4: memref<8x8xf32, #tpu.memory_space<vmem>>, %arg5: memref<8x1xf32, #tpu.memory_space<vmem>>) attributes {dimension_semantics = [#tpu.dimension_semantics<parallel>], iteration_bounds = array<i64: 1>, scalar_prefetch = 0 : i64, scratch_operands = 0 : i64, tpu.core_type = #tpu.core_type<tc>, window_params = [{transform_indices = @transform_0, window_bounds = array<i64: 8, 32>}, {pipeline_mode = #tpu.pipeline_mode<synchronous>, transform_indices = @transform_1, window_bounds = array<i64: 32, 9>}, {pipeline_mode = #tpu.pipeline_mode<synchronous>, transform_indices = @transform_2, window_bounds = array<i64: 1, 9>}, {transform_indices = @transform_3, window_bounds = array<i64: 8, 8>}, {transform_indices = @transform_4, window_bounds = array<i64: 8, 1>}]} {
    %c0 = arith.constant 0 : index
    %c0_0 = arith.constant 0 : index
    %0 = vector.load %arg1[%c0, %c0_0] : memref<8x32xf32, #tpu.memory_space<vmem>>, vector<8x32xf32>
    %c0_1 = arith.constant 0 : index
    %c0_2 = arith.constant 0 : index
    %1 = vector.load %arg2[%c0_1, %c0_2] : memref<32x9xf32, #tpu.memory_space<vmem>>, vector<32x9xf32>
    %cst = arith.constant dense<0.000000e+00> : vector<8x9xf32>
    %2 = tpu.matmul %0, %1, %cst {dimension_numbers = #tpu.dot_dimension_numbers<[1], [0], [0], [1], [0, 0, 1, 1], [], []>} : vector<8x32xf32>, vector<32x9xf32>, vector<8x9xf32> -> vector<8x9xf32>
    %c0_3 = arith.constant 0 : index
    %c0_4 = arith.constant 0 : index
    %3 = vector.load %arg3[%c0_3, %c0_4] : memref<1x9xf32, #tpu.memory_space<vmem>>, vector<1x9xf32>
    %4 = vector.broadcast %3 : vector<1x9xf32> to vector<8x9xf32>
    %5 = arith.addf %2, %4 : vector<8x9xf32>
    %6 = tpu.iota {dimensions = array<i32: 1>} : vector<8x9xi32>
    %c8_i32 = arith.constant 8 : i32
    %7 = vector.broadcast %c8_i32 : i32 to vector<8x9xi32>
    %8 = arith.cmpi slt, %6, %7 : vector<8x9xi32>
    %cst_5 = arith.constant 0xFF800000 : f32
    %9 = vector.broadcast %cst_5 : f32 to vector<8x9xf32>
    %10 = arith.select %8, %5, %9 : vector<8x9xi1>, vector<8x9xf32>
    %cst_6 = arith.constant dense<0xFF800000> : vector<8xf32>
    %11 = vector.multi_reduction <maximumf>, %10, %cst_6 [1] : vector<8x9xf32> to vector<8xf32>
    %12 = vector.shape_cast %11 : vector<8xf32> to vector<8x1xf32>
    %13 = vector.broadcast %12 : vector<8x1xf32> to vector<8x9xf32>
    %14 = arith.subf %10, %13 : vector<8x9xf32>
    %15 = math.exp %14 : vector<8x9xf32>
    %cst_7 = arith.constant dense<0.000000e+00> : vector<8xf32>
    %16 = vector.multi_reduction <add>, %15, %cst_7 [1] : vector<8x9xf32> to vector<8xf32>
    %17 = vector.shape_cast %16 : vector<8xf32> to vector<8x1xf32>
    %18 = vector.broadcast %17 : vector<8x1xf32> to vector<8x9xf32>
    %19 = arith.divf %15, %18 : vector<8x9xf32>
    %20 = vector.extract_strided_slice %19 {offsets = [0, 0], sizes = [8, 8], strides = [1, 1]} : vector<8x9xf32> to vector<8x8xf32>
    %c0_8 = arith.constant 0 : index
    %c0_9 = arith.constant 0 : index
    %21 = vector.load %arg4[%c0_8, %c0_9] : memref<8x8xf32, #tpu.memory_space<vmem>>, vector<8x8xf32>
    tpu.vector_store %arg4[%c0_8, %c0_9], %20 {strides = array<i32>} : memref<8x8xf32, #tpu.memory_space<vmem>>, vector<8x8xf32>,
    %22 = vector.extract_strided_slice %5 {offsets = [0, 8], sizes = [8, 1], strides = [1, 1]} : vector<8x9xf32> to vector<8x1xf32>
    %c0_10 = arith.constant 0 : index
    %c0_11 = arith.constant 0 : index
    %23 = vector.load %arg5[%c0_10, %c0_11] : memref<8x1xf32, #tpu.memory_space<vmem>>, vector<8x1xf32>
    tpu.vector_store %arg5[%c0_10, %c0_11], %22 {strides = array<i32>} : memref<8x1xf32, #tpu.memory_space<vmem>>, vector<8x1xf32>,
    return
  }
  func.func @transform_0(%arg0: i32) -> (i32, i32) {
    %c0_i32 = arith.constant 0 : i32
    %c0_i32_0 = arith.constant 0 : i32
    return %arg0, %c0_i32 : i32, i32
  }
  func.func @transform_1(%arg0: i32) -> (i32, i32) {
    %c0_i32 = arith.constant 0 : i32
    %c0_i32_0 = arith.constant 0 : i32
    %c0_i32_1 = arith.constant 0 : i32
    return %c0_i32, %c0_i32_0 : i32, i32
  }
  func.func @transform_2(%arg0: i32) -> (i32, i32) {
    %c0_i32 = arith.constant 0 : i32
    %c0_i32_0 = arith.constant 0 : i32
    %c0_i32_1 = arith.constant 0 : i32
    return %c0_i32, %c0_i32_0 : i32, i32
  }
  func.func @transform_3(%arg0: i32) -> (i32, i32) {
    %c0_i32 = arith.constant 0 : i32
    %c0_i32_0 = arith.constant 0 : i32
    return %arg0, %c0_i32 : i32, i32
  }
  func.func @transform_4(%arg0: i32) -> (i32, i32) {
    %c0_i32 = arith.constant 0 : i32
    %c0_i32_0 = arith.constant 0 : i32
    return %arg0, %c0_i32 : i32, i32
  }
}

</mosaic_0001>

<llo_original>
// kernel: tpu_custom_call.1
$region0: #{tpu_custom_call.1}
  #allocation0 [shape = 'u32[]', space=smem, size = 0x4, offset = 0x4, fixed_abs, tag = 'smem constant byte address 0x4 - core index']
  #allocation1 [shape = 'u32[144,128]{1,0:T(1,128)}', space=vmem, size = 0x12000, scoped, tag = 'internal scratch']
  %s0 = inlined_call_operand.vmem [shape: f32[8,32], index: 0, kind: input, shape index: {}]
  %s1 = inlined_call_operand.vmem [shape: f32[32,9], index: 1, kind: input, shape index: {}]
  %s2 = inlined_call_operand.vmem [shape: f32[1,9], index: 2, kind: input, shape index: {}]
  %s3 = inlined_call_operand.hbm [shape: f32[8,8], index: 3, kind: output, shape index: {0}]
  %s4 = inlined_call_operand.vmem [shape: f32[8,1], index: 4, kind: output, shape index: {1}]
  %5 = xla_tuple %s3, %s4
  %s6 = sld [smem:[#allocation0]]
  $region30: #{tpu_custom_call.1} parent=0
    _
  %s8 = ssub.s32 1, %s6
  %s9 = scalar_select 0, %s8, %s6
  $region1: #{tpu_custom_call.1} parent=0
    #allocation2 [shape = 'u8[4096]{0}', space=vmem, size = 0x1000, scoped, tag = 'output window, operand 0, single buffered']
    #allocation3 [shape = 's32[1]{0}', space=sflag, size = 0x4, scoped, tag = 'scoped memory for tpu_custom_call.1']
    %10 = vsyncpa [#allocation3], 0
    // Predicated region
    $region2: #{tpu_custom_call.1} parent=1 // pred_check
      _
    $region3: #{tpu_custom_call.1} parent=1 // pred_check_branch
      %12 = sbr.rel (0) target = $region5
    $region4: #{tpu_custom_call.1} parent=1 // pred_region
      _
    $region5: #{tpu_custom_call.1} parent=1 // pred_fallthru
      _
    // Predicated region
    $region6: #{tpu_custom_call.1} parent=1 // pred_check
      _
    $region7: #{tpu_custom_call.1} parent=1 // pred_check_branch
      %14 = sbr.rel (0) target = $region9
    $region8: #{tpu_custom_call.1} parent=1 // pred_region
      _
    $region9: #{tpu_custom_call.1} parent=1 // pred_fallthru
      _
    // Predicated region
    $region10: #{tpu_custom_call.1} parent=1 // pred_check
      _
    $region11: #{tpu_custom_call.1} parent=1 // pred_check_branch
      %16 = sbr.rel (0) target = $region13
    $region12: #{tpu_custom_call.1} parent=1 // pred_region
      _
    $region13: #{tpu_custom_call.1} parent=1 // pred_fallthru
      _
    %v17 = vld [vmem:[%s0] sm:$0xff]
    %v18 = vld [vmem:[%s1] sm:$0xff]
    %v19 = vld [vmem:[%s1 + $0x8] sm:$0xff]
    %v20 = vld [vmem:[%s1 + $0x10] sm:$0xff]
    %v21 = vld [vmem:[%s1 + $0x18] sm:$0xff]
    %v22 = vld [vmem:[%s2] sm:$0x1]
    %v24 = vlaneseq
    %v25 = vshrl.u32 %v24, 7
    %v26 = vsub.s32 0, %v25
    %v27 = vrot.slane %v22, %v26
    %vm29 = vcmask 261120
    %v31 = vsel %vm29, %v17, 0
    %33 = vmatprep.subr.mxu0 0.0
    %34 = vmatpush1.msra.mxu0 0.0
    %35 = vmatprep.subr.mxu0 0.0
    %36 = vmatpush1.msra.mxu0 0.0
    %37 = vmatprep.subr.mxu0 0.0
    %38 = vmatpush1.msra.mxu0 0.0
    %39 = vmatprep.subr.mxu0 0.0
    %40 = vmatpush1.msra.mxu0 0.0
    %41 = vmatprep.subr.mxu0 0.0
    %42 = vmatpush1.msra.mxu0 0.0
    %43 = vmatprep.subr.mxu0 0.0
    %44 = vmatpush1.msra.mxu0 0.0
    %45 = vmatprep.subr.mxu0 0.0
    %46 = vmatpush1.msra.mxu0 0.0
    %47 = vmatprep.subr.mxu0 0.0
    %48 = vmatpush1.msra.mxu0 0.0
    %49 = vmatprep.subr.mxu0 0.0
    %50 = vmatpush1.msra.mxu0 0.0
    %51 = vmatprep.subr.mxu0 0.0
    %52 = vmatpush1.msra.mxu0 0.0
    %53 = vmatprep.subr.mxu0 0.0
    %54 = vmatpush1.msra.mxu0 0.0
    %55 = vmatprep.subr.mxu0 0.0
    %56 = vmatpush1.msra.mxu0 0.0
    %57 = vmatprep.subr.mxu0 0.0
    %58 = vmatpush1.msra.mxu0 %v21
    %59 = vmatprep.subr.mxu0 0.0
    %60 = vmatpush1.msra.mxu0 %v20
    %61 = vmatprep.subr.mxu0 0.0
    %62 = vmatpush1.msra.mxu0 %v19
    %63 = vmatprep.subr.mxu0 0.0
    %64 = vmatpush1.msra.mxu0 %v18
    %65 = vmatprep.subr.mxu0 0.0
    %66 = vmatpush2.msra.mxu0 0.0
    %67 = vmatprep.subr.mxu0 0.0
    %68 = vmatpush2.msra.mxu0 0.0
    %69 = vmatprep.subr.mxu0 0.0
    %70 = vmatpush2.msra.mxu0 0.0
    %71 = vmatprep.subr.mxu0 0.0
    %72 = vmatpush2.msra.mxu0 0.0
    %73 = vmatprep.subr.mxu0 0.0
    %74 = vmatpush2.msra.mxu0 0.0
    %75 = vmatprep.subr.mxu0 0.0
    %76 = vmatpush2.msra.mxu0 0.0
    %77 = vmatprep.subr.mxu0 0.0
    %78 = vmatpush2.msra.mxu0 0.0
    %79 = vmatprep.subr.mxu0 0.0
    %80 = vmatpush2.msra.mxu0 0.0
    %81 = vmatprep.subr.mxu0 0.0
    %82 = vmatpush2.msra.mxu0 0.0
    %83 = vmatprep.subr.mxu0 0.0
    %84 = vmatpush2.msra.mxu0 0.0
    %85 = vmatprep.subr.mxu0 0.0
    %86 = vmatpush2.msra.mxu0 0.0
    %87 = vmatprep.subr.mxu0 0.0
    %88 = vmatpush2.msra.mxu0 0.0
    %89 = vmatprep.subr.mxu0 0.0
    %90 = vmatpush2.msra.mxu0 0.0
    %91 = vmatprep.subr.mxu0 0.0
    %92 = vmatpush2.msra.mxu0 0.0
    %93 = vmatprep.subr.mxu0 0.0
    %94 = vmatpush2.msra.mxu0 0.0
    %95 = vmatprep.subr.mxu0 0.0
    %96 = vmatpush2.msra.mxu0 0.0
    %97 = vmatprep.mubr.f32.mxu0 0.0
    %98 = vmatmul.mubr.f32.gmra.mxu0 %v31
    %v99 = vpop.f32.mrf.mxu0
    %v100 = vadd.f32 %v27, %v99
    %v101 = vpop.f32.mrf.mxu0
    %102 = vdwg.mxu0
    %v103 = vlaneseq
    %v104 = vand.u32 %v103, 127
    %vm105 = vcmp.lt.s32.totalorder %v104, 8
    %v106 = vsel %vm105, %v100, -inf
    %vm107 = vcmask 72704
    %v108 = vsel %vm107, %v106, -inf
    %109 = vmax.xlane.f32.xlu0 %v108
    %v110 = vpop.xlane.xlu0 %109
    %v111 = vsub.f32 %v106, %v110
    %v112 = vmul.f32 %v111, 1.442695
    %v113 = vpow.pop %v112
    %v114 = vsel %vm107, %v113, 0.0
    %115 = vadd.xlane.f32.xlu0 %v114
    %v116 = vpop.xlane.xlu0 %115
    %v117 = vrcp.pop %v116
    %v118 = vmul.f32 %v113, %v117
    %vm119 = vcmask 64512
    %120 = vst.msk [vmem:[#allocation2] sm:$0xff] %vm119, %v118
    %122 = vrot.lane.b32.xlu0 %v100, 120
    %v123 = vpop.permute.xlu0 %122
    %vm125 = vcmask 7168
    %126 = vst.msk [vmem:[%s4] sm:$0xff] %vm125, %v123
    // Predicated region
    $region14: #{tpu_custom_call.1} parent=1 // pred_check
      _
    $region15: #{tpu_custom_call.1} parent=1 // pred_check_branch
      %128 = sbr.rel (0) target = $region17
    $region16: #{tpu_custom_call.1} parent=1 // pred_region
      %s130 = ssub.s32 128, 128
      %131 = vsyncadd [#allocation3], %s130
      %s133 = sshll.u32 [#allocation2], 4
      %s134 = int_to_ptr.vmem [resolvable:$true] %s133
      %136 = dma.vmem_to_hbm [thread:$0]  %s134, 128, %s3, [#allocation3]
    $region17: #{tpu_custom_call.1} parent=1 // pred_fallthru
      _
    // Predicated region
    $region18: #{tpu_custom_call.1} parent=1 // pred_check
      _
    $region19: #{tpu_custom_call.1} parent=1 // pred_check_branch
      %138 = sbr.rel (0) target = $region21
    $region20: #{tpu_custom_call.1} parent=1 // pred_region
      _
    $region21: #{tpu_custom_call.1} parent=1 // pred_fallthru
      _
    // Predicated region
    $region22: #{tpu_custom_call.1} parent=1 // pred_check
      _
    $region23: #{tpu_custom_call.1} parent=1 // pred_check_branch
      %140 = sbr.rel (0) target = $region25
    $region24: #{tpu_custom_call.1} parent=1 // pred_region
      %141 = dma.done [#allocation3], 128
    $region25: #{tpu_custom_call.1} parent=1 // pred_fallthru
      _
    // Predicated region
    $region26: #{tpu_custom_call.1} parent=1 // pred_check
      _
    $region27: #{tpu_custom_call.1} parent=1 // pred_check_branch
      %143 = sbr.rel (0) target = $region29
    $region28: #{tpu_custom_call.1} parent=1 // pred_region
      _
    $region29: #{tpu_custom_call.1} parent=1 // pred_fallthru
      _
    %144 = vsyncpa [#allocation3], 1

</llo_original>
